<compile_context>
chip_gen: v6e
topology: v6e:2x2x1
jax: 0.10.0
libtpu: 0.0.40
codegen_flags: <defaults>
</compile_context>

<pallas_src>
import functools

import jax
import jax.numpy as jnp
from jax import lax
from jax.experimental import pallas as pl
from jax.experimental.pallas import tpu as pltpu

EMBEDDING_DIM = 256
NUM_CLASSES = 7          # RAF-DB has 7 expression classes
STAGES = ((64, 3, 1), (128, 4, 2), (256, 6, 2), (512, 3, 2))  # wide_resnet50_2
WIDTH_FACTOR = 2         # width_per_group=128 -> width = planes * 2
EXPANSION = 4

_LANE = 128
_TM_CAP = 512                          # max rows per M block
_WEIGHT_TILE_BYTES = 5 * 1024 * 1024   # per-grid-step weight-tile budget (bf16)
_VMEM_LIMIT = 40 * 1024 * 1024         # safe on v5e/v6e (128 MiB) and v7x (64 MiB)
_BUFFERED = getattr(pl, "Buffered", None)


def _detect_megacore():
    """True on chips with 2 TensorCores sharing a grid (v4 / v5p / v7x)."""
    try:
        kind = jax.devices()[0].device_kind.lower()
    except Exception:
        return False
    return any(t in kind for t in ("v4", "v5p", "v7", "tpu7"))


_MEGACORE = _detect_megacore()


# ----------------------------------------------------------------------------
# Pallas kernels: tiled matmul + fused bias / ReLU / residual epilogue
# ----------------------------------------------------------------------------
def _mm_kernel_multi(*refs, relu, has_res):
    """K-tiled matmul; bias folded into the accumulator init."""
    if has_res:
        a_ref, b_ref, c_ref, r_ref, o_ref, acc_ref = refs
    else:
        a_ref, b_ref, c_ref, o_ref, acc_ref = refs
    k = pl.program_id(2)

    @pl.when(k == 0)
    def _():
        acc_ref[...] = jnp.broadcast_to(c_ref[...], acc_ref.shape).astype(jnp.float32)

    acc_ref[...] += jnp.dot(a_ref[...], b_ref[...],
                            preferred_element_type=jnp.float32)

    @pl.when(k == pl.num_programs(2) - 1)
    def _():
        y = acc_ref[...]
        if has_res:
            y = y + r_ref[...].astype(jnp.float32)
        if relu:
            y = jnp.maximum(y, 0.0)
        o_ref[...] = y.astype(o_ref.dtype)


def _mm_kernel_single(*refs, relu, has_res):
    """Whole-K matmul: no K grid, no accumulator scratch, no init/epilogue branches."""
    if has_res:
        a_ref, b_ref, c_ref, r_ref, o_ref = refs
    else:
        a_ref, b_ref, c_ref, o_ref = refs
    y = jnp.dot(a_ref[...], b_ref[...], preferred_element_type=jnp.float32)
    y = y + c_ref[...]
    if has_res:
        y = y + r_ref[...].astype(jnp.float32)
    if relu:
        y = jnp.maximum(y, 0.0)
    o_ref[...] = y.astype(o_ref.dtype)


# ----------------------------------------------------------------------------
# Tiling helpers
# ----------------------------------------------------------------------------
def _round_up(x, m):
    return (x + m - 1) // m * m


def _choose_tm(m):
    """Per-layer M tile: multiple of 16 (bf16 sublane), <= _TM_CAP rows/block."""
    if m <= _TM_CAP:
        return max(16, _round_up(m, 16))
    nblk = -(-m // _TM_CAP)
    return _round_up(-(-m // nblk), 16)


def _divisors_lane(n):
    return [d for d in range(_LANE, n + 1, _LANE) if n % d == 0]


def _choose_kn(Kp, Np, m_blocks):
    """Pick (TK, TN): fewest grid steps, then biggest weight tile, within budget.
    On megacore chips keep >= 2 parallel N blocks when the M grid is 1."""
    cands = []
    for tn in _divisors_lane(Np):
        for tk in _divisors_lane(Kp):
            if tk * tn * 2 > _WEIGHT_TILE_BYTES:
                continue
            steps = (Np // tn) * (Kp // tk)
            cands.append((steps, -(tk * tn), tk, tn))
    cands.sort()
    if _MEGACORE and m_blocks == 1 and Np >= 2 * _LANE:
        multi = [c for c in cands if (Np // c[3]) >= 2]
        if multi:
            return multi[0][2], multi[0][3]
    return cands[0][2], cands[0][3]


def _weight_spec(TK, TN, k_steps):
    idx = lambda i, j, k: (k, j)
    if k_steps >= 3 and _BUFFERED is not None:
        try:
            return pl.BlockSpec((TK, TN), idx, pipeline_mode=_BUFFERED(3))
        except TypeError:          # older BlockSpec without pipeline_mode
            pass
    return pl.BlockSpec((TK, TN), idx)


# ----------------------------------------------------------------------------
# Matmul wrapper: out = relu?( a @ w + bias (+ residual) )
#   a:        (Ma, Ka) activations (bf16 or f32).  Rows beyond `m` may be
#             garbage (never read for real outputs); Ka <= Kp and the extra
#             weight rows are zero.
#   w:        (Kp, Np) bf16 pre-transposed / pre-padded / BN-scale-folded.
#   bias:     (1, Np) f32, zero-padded.
#   residual: optional (Mr, Nr<=Np), fused add before the ReLU.
# Returns the padded (Mp, Np) bf16 activation.  Padded N columns are exactly
# zero (zero weight cols + zero bias), so the result can be chained directly
# into the next layer; padded M rows may be non-zero and must be sliced off
# before any reshape / pooling / final output.
# ----------------------------------------------------------------------------
def matmul_fused(a, m, w, bias, relu, residual=None):
    Kp, Np = w.shape
    Ma, Ka = a.shape
    TM = _choose_tm(m)
    Mp = _round_up(m, TM)
    m_blocks = Mp // TM
    TK, TN = _choose_kn(Kp, Np, m_blocks)
    n_blocks = Np // TN
    k_steps = Kp // TK
    has_res = residual is not None

    a_p = a.astype(jnp.bfloat16)
    if (Ma, Ka) != (Mp, Kp):
        a_p = jnp.pad(a_p[:Mp, :Kp],
                      ((0, Mp - min(Ma, Mp)), (0, Kp - min(Ka, Kp))))

    args = [a_p, w, bias]
    if has_res:
        r = residual.astype(jnp.bfloat16)
        Mr, Nr = r.shape
        if (Mr, Nr) != (Mp, Np):
            r = jnp.pad(r[:Mp, :Np],
                        ((0, Mp - min(Mr, Mp)), (0, Np - min(Nr, Np))))
        args.append(r)

    bytes_accessed = (Mp * Kp + Kp * Np + Mp * Np
                      + (Mp * Np if has_res else 0)) * 2 + Np * 4
    ce = pl.CostEstimate(flops=2 * Mp * Kp * Np, transcendentals=0,
                         bytes_accessed=bytes_accessed)

    if k_steps == 1:
        in_specs = [pl.BlockSpec((TM, Kp), lambda i, j: (i, 0)),
                    pl.BlockSpec((Kp, TN), lambda i, j: (0, j)),
                    pl.BlockSpec((1, TN), lambda i, j: (0, j))]
        if has_res:
            in_specs.append(pl.BlockSpec((TM, TN), lambda i, j: (i, j)))
        return pl.pallas_call(
            functools.partial(_mm_kernel_single, relu=relu, has_res=has_res),
            out_shape=jax.ShapeDtypeStruct((Mp, Np), jnp.bfloat16),
            grid_spec=pltpu.PrefetchScalarGridSpec(
                num_scalar_prefetch=0,
                grid=(m_blocks, n_blocks),
                in_specs=in_specs,
                out_specs=pl.BlockSpec((TM, TN), lambda i, j: (i, j))),
            compiler_params=pltpu.CompilerParams(
                dimension_semantics=("parallel", "parallel"),
                vmem_limit_bytes=_VMEM_LIMIT),
            cost_estimate=ce,
        )(*args)

    in_specs = [pl.BlockSpec((TM, TK), lambda i, j, k: (i, k)),
                _weight_spec(TK, TN, k_steps),
                pl.BlockSpec((1, TN), lambda i, j, k: (0, j))]
    if has_res:
        in_specs.append(pl.BlockSpec((TM, TN), lambda i, j, k: (i, j)))
    return pl.pallas_call(
        functools.partial(_mm_kernel_multi, relu=relu, has_res=has_res),
        out_shape=jax.ShapeDtypeStruct((Mp, Np), jnp.bfloat16),
        grid_spec=pltpu.PrefetchScalarGridSpec(
            num_scalar_prefetch=0,
            grid=(m_blocks, n_blocks, k_steps),
            in_specs=in_specs,
            out_specs=pl.BlockSpec((TM, TN), lambda i, j, k: (i, j)),
            scratch_shapes=[pltpu.VMEM((TM, TN), jnp.float32)]),
        compiler_params=pltpu.CompilerParams(
            dimension_semantics=("parallel", "parallel", "arbitrary"),
            vmem_limit_bytes=_VMEM_LIMIT),
        cost_estimate=ce,
    )(*args)


# ----------------------------------------------------------------------------
# Conv glue (im2col / pooling lives in plain JAX; matmuls are the kernels)
# ----------------------------------------------------------------------------
def im2col_nhwc(x, kh, kw, stride, pad):
    """x: (B, H, W, C) NHWC -> (B*Ho*Wo, kh*kw*C) patches (slice+concat)."""
    B, H, W, C = x.shape
    Ho = (H + 2 * pad - kh) // stride + 1
    Wo = (W + 2 * pad - kw) // stride + 1
    xp = jnp.pad(x, ((0, 0), (pad, pad), (pad, pad), (0, 0))) if pad else x
    parts = []
    for dy in range(kh):
        for dx in range(kw):
            parts.append(lax.slice(
                xp, (0, dy, dx, 0),
                (B, dy + (Ho - 1) * stride + 1, dx + (Wo - 1) * stride + 1, C),
                (1, stride, stride, 1)))
    patches = jnp.concatenate(parts, axis=-1).reshape(B * Ho * Wo, kh * kw * C)
    return patches, Ho, Wo


# ----------------------------------------------------------------------------
# Model forward (activations are padded bf16 (Mp, Cp) slabs throughout)
# ----------------------------------------------------------------------------
def bottleneck(x, m, B, H, W, p, stride):
    cin = x.shape[1]
    out = matmul_fused(x, m, p["c1"]["w"], p["c1"]["b"], relu=True)           # 1x1
    x3 = out[:m].reshape(B, H, W, out.shape[1])
    patches, Ho, Wo = im2col_nhwc(x3, 3, 3, stride, 1)
    m_out = B * Ho * Wo
    out = matmul_fused(patches, m_out, p["c2"]["w"], p["c2"]["b"], relu=True)  # 3x3
    if "cd" in p:
        if stride != 1:
            xs = x[:m].reshape(B, H, W, cin)[:, ::stride, ::stride, :]
            xs = xs.reshape(m_out, cin)
        else:
            xs = x
        identity = matmul_fused(xs, m_out, p["cd"]["w"], p["cd"]["b"], relu=False)
    else:
        identity = x
    # 1x1 conv3 with fused residual add + ReLU epilogue
    y = matmul_fused(out, m_out, p["c3"]["w"], p["c3"]["b"], relu=True,
                     residual=identity)
    return y, m_out, Ho, Wo


def encoder_forward(p, x):
    B = x.shape[0]
    x = jnp.transpose(x, (0, 2, 3, 1)).astype(jnp.bfloat16)                  # NCHW -> NHWC
    patches, Ho, Wo = im2col_nhwc(x, 7, 7, 2, 3)
    m = B * Ho * Wo
    x = matmul_fused(patches, m, p["conv1"]["w"], p["conv1"]["b"], relu=True)
    x = x[:m].reshape(B, Ho, Wo, x.shape[1]).astype(jnp.float32)
    x = lax.reduce_window(x, -jnp.inf, lax.max, (1, 3, 3, 1), (1, 2, 2, 1),
                          padding=((0, 0), (1, 1), (1, 1), (0, 0)))           # maxpool 3x3 s2 p1
    _, H, W, C = x.shape
    m = B * H * W
    x = x.reshape(m, C)
    for blocks, (planes, nblocks, stride) in zip(p["layers"], STAGES):
        for bi, blk in enumerate(blocks):
            x, m, H, W = bottleneck(x, m, B, H, W, blk, stride if bi == 0 else 1)
    # global average pool + flatten (slice off padded rows first)
    return x[:m].astype(jnp.float32).reshape(B, H * W, x.shape[1]).mean(axis=1)


def mlp_forward(layers, x, m, relus):
    for layer, r in zip(layers, relus):
        x = matmul_fused(x, m, layer["w"], layer["b"], relu=r)
    return x


@functools.partial(jax.jit, static_argnames=("mode",))
def hncl_forward(params, x, mode="contrastive"):
    B = x.shape[0]
    features = encoder_forward(params["encoder"], x)
    if mode == "contrastive":
        z = mlp_forward(params["projector"], features, B, (True, True, False))
        p = mlp_forward(params["predictor"], z, B, (True, False))
        z_out = lax.stop_gradient(z)[:B, :EMBEDDING_DIM].astype(jnp.float32)
        p_out = p[:B, :EMBEDDING_DIM].astype(jnp.float32)
        return z_out, p_out
    elif mode == "classify":
        # Dropout -> identity in eval mode
        logits = mlp_forward(params["classifier"], features, B, (True, True, False))
        return logits[:B, :NUM_CLASSES].astype(jnp.float32)


# ----------------------------------------------------------------------------
# Deterministic synthetic parameter initialization (raw, PyTorch-like)
# ----------------------------------------------------------------------------
class KeyGen:
    def __init__(self, seed):
        self.key = jax.random.PRNGKey(seed)

    def __call__(self):
        self.key, sub = jax.random.split(self.key)
        return sub


def init_conv(kg, o, c, kh, kw):
    std = (2.0 / (c * kh * kw)) ** 0.5
    return jax.random.normal(kg(), (o, c, kh, kw), jnp.float32) * std


def init_bn(kg, c, eps=1e-5):
    gamma = 1.0 + 0.1 * jax.random.normal(kg(), (c,), jnp.float32)
    beta = 0.1 * jax.random.normal(kg(), (c,), jnp.float32)
    mean = jnp.zeros((c,), jnp.float32)
    var = jnp.ones((c,), jnp.float32)
    s = gamma / jnp.sqrt(var + eps)
    return {"scale": s, "bias": beta - mean * s}


def init_linear(kg, in_f, out_f, with_bn, eps=1e-5):
    std = (2.0 / in_f) ** 0.5
    w = jax.random.normal(kg(), (out_f, in_f), jnp.float32) * std
    b = 0.01 * jax.random.normal(kg(), (out_f,), jnp.float32)
    if with_bn:
        gamma = 1.0 + 0.1 * jax.random.normal(kg(), (out_f,), jnp.float32)
        beta = 0.1 * jax.random.normal(kg(), (out_f,), jnp.float32)
        mean = jnp.zeros((out_f,), jnp.float32)
        var = jnp.ones((out_f,), jnp.float32)
        s = gamma / jnp.sqrt(var + eps)
        return {"w": w, "scale": s, "bias": (b - mean) * s + beta}
    return {"w": w, "scale": jnp.ones((out_f,), jnp.float32), "bias": b}


def init_encoder(kg):
    p = {"conv1": init_conv(kg, 64, 2, 7, 7), "bn1": init_bn(kg, 64), "layers": []}
    in_ch = 64
    for planes, nblocks, stride in STAGES:
        width = planes * WIDTH_FACTOR
        out_ch = planes * EXPANSION
        blocks = []
        for bi in range(nblocks):
            blk = {
                "w1": init_conv(kg, width, in_ch, 1, 1), "bn1": init_bn(kg, width),
                "w2": init_conv(kg, width, width, 3, 3), "bn2": init_bn(kg, width),
                "w3": init_conv(kg, out_ch, width, 1, 1), "bn3": init_bn(kg, out_ch),
            }
            if bi == 0:   # downsample (stride != 1 or channel change)
                blk["wd"] = init_conv(kg, out_ch, in_ch, 1, 1)
                blk["bnd"] = init_bn(kg, out_ch)
            blocks.append(blk)
            in_ch = out_ch
        p["layers"].append(blocks)
    return p


def init_hncl(seed=42):
    kg = KeyGen(seed)
    return {
        "encoder": init_encoder(kg),
        "projector": [
            init_linear(kg, 2048, 2048, with_bn=True),
            init_linear(kg, 2048, 2048, with_bn=True),
            init_linear(kg, 2048, EMBEDDING_DIM, with_bn=True),
        ],
        "predictor": [
            init_linear(kg, EMBEDDING_DIM, 4096, with_bn=True),
            init_linear(kg, 4096, EMBEDDING_DIM, with_bn=False),
        ],
        "classifier": [
            init_linear(kg, 2048, 1024, with_bn=True),
            init_linear(kg, 1024, 512, with_bn=True),
            init_linear(kg, 512, NUM_CLASSES, with_bn=False),
        ],
    }


# ----------------------------------------------------------------------------
# One-time parameter preparation for the kernels: transpose to (K, N), fold BN
# scale into columns, pad input-channel / K / N dims to 128 multiples, bf16
# weights + (1, Np) f32 padded biases.
# ----------------------------------------------------------------------------
def prep_conv(w, bn, pad_cin=True):
    O, C, kh, kw = w.shape
    wm = jnp.transpose(w, (2, 3, 1, 0))               # (kh, kw, C, O): matches im2col order
    if pad_cin:
        Cp = _round_up(C, _LANE)
        if Cp != C:
            wm = jnp.pad(wm, ((0, 0), (0, 0), (0, Cp - C), (0, 0)))
            C = Cp
    wm = wm.reshape(kh * kw * C, O) * bn["scale"][None, :]
    Kp = _round_up(wm.shape[0], _LANE)
    Np = _round_up(O, _LANE)
    wm = jnp.pad(wm, ((0, Kp - wm.shape[0]), (0, Np - O)))
    b = jnp.pad(bn["bias"].reshape(1, O), ((0, 0), (0, Np - O)))
    return {"w": wm.astype(jnp.bfloat16), "b": b.astype(jnp.float32)}


def prep_linear(layer):
    out_f, in_f = layer["w"].shape
    wm = layer["w"].T * layer["scale"][None, :]
    Kp = _round_up(in_f, _LANE)
    Np = _round_up(out_f, _LANE)
    wm = jnp.pad(wm, ((0, Kp - in_f), (0, Np - out_f)))
    b = jnp.pad(layer["bias"].reshape(1, out_f), ((0, 0), (0, Np - out_f)))
    return {"w": wm.astype(jnp.bfloat16), "b": b.astype(jnp.float32)}


def prepare_params(raw):
    enc = raw["encoder"]
    p_enc = {"conv1": prep_conv(enc["conv1"], enc["bn1"], pad_cin=False), "layers": []}
    for blocks in enc["layers"]:
        pblocks = []
        for blk in blocks:
            pb = {"c1": prep_conv(blk["w1"], blk["bn1"]),
                  "c2": prep_conv(blk["w2"], blk["bn2"]),
                  "c3": prep_conv(blk["w3"], blk["bn3"])}
            if "wd" in blk:
                pb["cd"] = prep_conv(blk["wd"], blk["bnd"])
            pblocks.append(pb)
        p_enc["layers"].append(pblocks)
    return {
        "encoder": p_enc,
        "projector": [prep_linear(l) for l in raw["projector"]],
        "predictor": [prep_linear(l) for l in raw["predictor"]],
        "classifier": [prep_linear(l) for l in raw["classifier"]],
    }


# ----------------------------------------------------------------------------
if __name__ == "__main__":
    # ---- quick single-matmul self-check against an XLA reference -----------
    at = jax.random.normal(jax.random.PRNGKey(1), (70, 200), jnp.float32)
    wt = jax.random.normal(jax.random.PRNGKey(2), (200, 300), jnp.float32) * 0.05
    bt = jax.random.normal(jax.random.PRNGKey(3), (300,), jnp.float32) * 0.1
    rt = jax.random.normal(jax.random.PRNGKey(4), (70, 300), jnp.float32)
    wp = jnp.pad(wt, ((0, 56), (0, 84))).astype(jnp.bfloat16)      # (256, 384)
    bp = jnp.pad(bt.reshape(1, 300), ((0, 0), (0, 84)))
    got = matmul_fused(at, 70, wp, bp, relu=True, residual=rt)[:70, :300]
    want = jnp.maximum(at @ wt + bt + rt, 0.0)
    err = float(jnp.max(jnp.abs(got.astype(jnp.float32) - want)))
    assert err < 0.15, f"matmul_fused self-check failed, max err {err}"

    # ---- full forward -------------------------------------------------------
    raw_params = init_hncl(seed=42)
    params = jax.block_until_ready(prepare_params(raw_params))    # one-time prep

    # Module input: 2-channel 48x48 images (modified first conv takes 2 channels).
    x = jax.random.normal(jax.random.PRNGKey(0), (2, 2, 48, 48), jnp.float32)

    z, p = hncl_forward(params, x, mode="contrastive")
    z, p = jax.block_until_ready((z, p))

    assert z.shape == (2, EMBEDDING_DIM) and p.shape == (2, EMBEDDING_DIM)
    assert jnp.all(jnp.isfinite(z)) and jnp.all(jnp.isfinite(p))
    print("KERNEL_OK")
</pallas_src>

<mosaic_0001>
module attributes {stable_mosaic.version = 11 : i64} {
  func.func @_mm_kernel_single(%arg0: i32, %arg1: i32, %arg2: memref<80x256xbf16, #tpu.memory_space<vmem>>, %arg3: memref<256x384xbf16, #tpu.memory_space<vmem>>, %arg4: memref<1x384xf32, #tpu.memory_space<vmem>>, %arg5: memref<80x384xbf16, #tpu.memory_space<vmem>>, %arg6: memref<80x384xbf16, #tpu.memory_space<vmem>>) attributes {dimension_semantics = [#tpu.dimension_semantics<parallel>, #tpu.dimension_semantics<parallel>], iteration_bounds = array<i64: 1, 1>, scalar_prefetch = 0 : i64, scratch_operands = 0 : i64, tpu.core_type = #tpu.core_type<tc>, window_params = [{transform_indices = @transform_0, window_bounds = array<i64: 80, 256>}, {transform_indices = @transform_1, window_bounds = array<i64: 256, 384>}, {transform_indices = @transform_2, window_bounds = array<i64: 1, 384>}, {transform_indices = @transform_3, window_bounds = array<i64: 80, 384>}, {transform_indices = @transform_4, window_bounds = array<i64: 80, 384>}]} {
    %c0 = arith.constant 0 : index
    %c0_0 = arith.constant 0 : index
    %0 = vector.load %arg2[%c0, %c0_0] : memref<80x256xbf16, #tpu.memory_space<vmem>>, vector<80x256xbf16>
    %c0_1 = arith.constant 0 : index
    %c0_2 = arith.constant 0 : index
    %1 = vector.load %arg3[%c0_1, %c0_2] : memref<256x384xbf16, #tpu.memory_space<vmem>>, vector<256x384xbf16>
    %cst = arith.constant dense<0.000000e+00> : vector<80x384xf32>
    %2 = tpu.matmul %0, %1, %cst {dimension_numbers = #tpu.dot_dimension_numbers<[1], [0], [0], [1], [0, 0, 1, 1], [], []>} : vector<80x256xbf16>, vector<256x384xbf16>, vector<80x384xf32> -> vector<80x384xf32>
    %c0_3 = arith.constant 0 : index
    %c0_4 = arith.constant 0 : index
    %3 = vector.load %arg4[%c0_3, %c0_4] : memref<1x384xf32, #tpu.memory_space<vmem>>, vector<1x384xf32>
    %4 = vector.broadcast %3 : vector<1x384xf32> to vector<80x384xf32>
    %5 = arith.addf %2, %4 : vector<80x384xf32>
    %c0_5 = arith.constant 0 : index
    %c0_6 = arith.constant 0 : index
    %6 = vector.load %arg5[%c0_5, %c0_6] : memref<80x384xbf16, #tpu.memory_space<vmem>>, vector<80x384xbf16>
    %7 = arith.extf %6 : vector<80x384xbf16> to vector<80x384xf32>
    %8 = arith.addf %5, %7 : vector<80x384xf32>
    %cst_7 = arith.constant 0.000000e+00 : f32
    %9 = vector.broadcast %cst_7 : f32 to vector<80x384xf32>
    %10 = arith.maximumf %8, %9 : vector<80x384xf32>
    %11 = arith.truncf %10 : vector<80x384xf32> to vector<80x384xbf16>
    %c0_8 = arith.constant 0 : index
    %c0_9 = arith.constant 0 : index
    %12 = vector.load %arg6[%c0_8, %c0_9] : memref<80x384xbf16, #tpu.memory_space<vmem>>, vector<80x384xbf16>
    tpu.vector_store %arg6[%c0_8, %c0_9], %11 {strides = array<i32>} : memref<80x384xbf16, #tpu.memory_space<vmem>>, vector<80x384xbf16>,
    return
  }
  func.func @transform_0(%arg0: i32, %arg1: i32) -> (i32, i32) {
    %c0_i32 = arith.constant 0 : i32
    %c0_i32_0 = arith.constant 0 : i32
    return %arg0, %c0_i32 : i32, i32
  }
  func.func @transform_1(%arg0: i32, %arg1: i32) -> (i32, i32) {
    %c0_i32 = arith.constant 0 : i32
    %c0_i32_0 = arith.constant 0 : i32
    return %c0_i32, %arg1 : i32, i32
  }
  func.func @transform_2(%arg0: i32, %arg1: i32) -> (i32, i32) {
    %c0_i32 = arith.constant 0 : i32
    %c0_i32_0 = arith.constant 0 : i32
    return %c0_i32, %arg1 : i32, i32
  }
  func.func @transform_3(%arg0: i32, %arg1: i32) -> (i32, i32) {
    %c0_i32 = arith.constant 0 : i32
    return %arg0, %arg1 : i32, i32
  }
  func.func @transform_4(%arg0: i32, %arg1: i32) -> (i32, i32) {
    %c0_i32 = arith.constant 0 : i32
    return %arg0, %arg1 : i32, i32
  }
}

</mosaic_0001>

<llo_original>
// kernel: tpu_custom_call.1
$region0: #{tpu_custom_call.1}
  #allocation0 [shape = 'u32[]', space=smem, size = 0x4, offset = 0x4, fixed_abs, tag = 'smem constant byte address 0x4 - core index']
  #allocation1 [shape = 'u32[144,128]{1,0:T(1,128)}', space=vmem, size = 0x12000, scoped, tag = 'internal scratch']
  %s0 = inlined_call_operand.hbm [shape: bf16[80,256], index: 0, kind: input, shape index: {}]
  %s1 = inlined_call_operand.hbm [shape: bf16[256,384], index: 1, kind: input, shape index: {}]
  %s2 = inlined_call_operand.vmem [shape: f32[1,384], index: 2, kind: input, shape index: {}]
  %s3 = inlined_call_operand.hbm [shape: bf16[80,384], index: 3, kind: input, shape index: {}]
  %s4 = inlined_call_operand.hbm [shape: bf16[80,384], index: 4, kind: output, shape index: {}]
  %s5 = sld [smem:[#allocation0]]
  $region38: #{tpu_custom_call.1} parent=0
    _
  %s7 = ssub.s32 1, %s5
  %s8 = scalar_select 0, %s7, %s5
  $region1: #{tpu_custom_call.1} parent=0
    #allocation2 [shape = 'u8[40960]{0}', space=vmem, size = 0xa000, scoped, tag = 'input window, operand 0, single buffered']
    #allocation3 [shape = 's32[1]{0}', space=sflag, size = 0x4, scoped, tag = 'scoped memory for tpu_custom_call.1']
    #allocation4 [shape = 's32[1]{0}', space=sflag, size = 0x4, scoped, tag = 'scoped memory for tpu_custom_call.1']
    #allocation5 [shape = 'u8[196608]{0}', space=vmem, size = 0x30000, scoped, tag = 'input window, operand 1, single buffered']
    #allocation6 [shape = 's32[1]{0}', space=sflag, size = 0x4, scoped, tag = 'scoped memory for tpu_custom_call.1']
    #allocation7 [shape = 'u8[61440]{0}', space=vmem, size = 0xf000, scoped, tag = 'input window, operand 3, single buffered']
    #allocation8 [shape = 'u8[61440]{0}', space=vmem, size = 0xf000, scoped, tag = 'output window, operand 0, single buffered']
    %9 = vsyncpa [#allocation3], 0
    %10 = vsyncpa [#allocation6], 0
    %11 = vsyncpa [#allocation4], 0
    // Predicated region
    $region2: #{tpu_custom_call.1} parent=1 // pred_check
      _
    $region3: #{tpu_custom_call.1} parent=1 // pred_check_branch
      %13 = sbr.rel (0) target = $region5
    $region4: #{tpu_custom_call.1} parent=1 // pred_region
      %s15 = ssub.s32 1280, 1280
      %16 = vsyncadd [#allocation3], %s15
      %s17 = sshll.u32 [#allocation2], 4
      %s18 = int_to_ptr.vmem [resolvable:$true] %s17
      %23 = dma.hbm_to_vmem [thread:$0]  %s0, 1280, %s18, [#allocation3], 128, 128, 8
    $region5: #{tpu_custom_call.1} parent=1 // pred_fallthru
      _
    // Predicated region
    $region6: #{tpu_custom_call.1} parent=1 // pred_check
      _
    $region7: #{tpu_custom_call.1} parent=1 // pred_check_branch
      %25 = sbr.rel (0) target = $region9
    $region8: #{tpu_custom_call.1} parent=1 // pred_region
      %s27 = ssub.s32 6144, 6144
      %28 = vsyncadd [#allocation6], %s27
      %s29 = sshll.u32 [#allocation5], 4
      %s30 = int_to_ptr.vmem [resolvable:$true] %s29
      %35 = dma.hbm_to_vmem [thread:$0]  %s1, 6144, %s30, [#allocation6], 192, 192, 12
    $region9: #{tpu_custom_call.1} parent=1 // pred_fallthru
      _
    // Predicated region
    $region10: #{tpu_custom_call.1} parent=1 // pred_check
      _
    $region11: #{tpu_custom_call.1} parent=1 // pred_check_branch
      %37 = sbr.rel (0) target = $region13
    $region12: #{tpu_custom_call.1} parent=1 // pred_region
      _
    $region13: #{tpu_custom_call.1} parent=1 // pred_fallthru
      _
    // Predicated region
    $region14: #{tpu_custom_call.1} parent=1 // pred_check
      _
    $region15: #{tpu_custom_call.1} parent=1 // pred_check_branch
      %39 = sbr.rel (0) target = $region17
    $region16: #{tpu_custom_call.1} parent=1 // pred_region
      %s41 = ssub.s32 1920, 1920
      %42 = vsyncadd [#allocation6], %s41
      %s43 = sshll.u32 [#allocation7], 4
      %s44 = int_to_ptr.vmem [resolvable:$true] %s43
      %49 = dma.hbm_to_vmem [thread:$0]  %s3, 1920, %s44, [#allocation6], 192, 192, 12
    $region17: #{tpu_custom_call.1} parent=1 // pred_fallthru
      _
    // Predicated region
    $region18: #{tpu_custom_call.1} parent=1 // pred_check
      _
    $region19: #{tpu_custom_call.1} parent=1 // pred_check_branch
      %51 = sbr.rel (0) target = $region21
    $region20: #{tpu_custom_call.1} parent=1 // pred_region
      %52 = dma.done [#allocation3], 1280
    $region21: #{tpu_custom_call.1} parent=1 // pred_fallthru
      _
    // Predicated region
    $region22: #{tpu_custom_call.1} parent=1 // pred_check
      _
    $region23: #{tpu_custom_call.1} parent=1 // pred_check_branch
      %54 = sbr.rel (0) target = $region25
    $region24: #{tpu_custom_call.1} parent=1 // pred_region
      %55 = dma.done [#allocation6], 6144
    $region25: #{tpu_custom_call.1} parent=1 // pred_fallthru
      _
    // Predicated region
    $region26: #{tpu_custom_call.1} parent=1 // pred_check
      _
    $region27: #{tpu_custom_call.1} parent=1 // pred_check_branch
      %57 = sbr.rel (0) target = $region29
    $region28: #{tpu_custom_call.1} parent=1 // pred_region
      %58 = dma.done [#allocation6], 1920
    $region29: #{tpu_custom_call.1} parent=1 // pred_fallthru
      _
    %v60 = vld [vmem:[#allocation2] sm:$0xff]
    %v61 = vld [vmem:[#allocation2 + $0x8] sm:$0xff]
    %v62 = vld [vmem:[#allocation2 + $0x10] sm:$0xff]
    %v63 = vld [vmem:[#allocation2 + $0x18] sm:$0xff]
    %v64 = vld [vmem:[#allocation2 + $0x20] sm:$0xff]
    %v65 = vld [vmem:[#allocation2 + $0x28] sm:$0xff]
    %v66 = vld [vmem:[#allocation2 + $0x30] sm:$0xff]
    %v67 = vld [vmem:[#allocation2 + $0x38] sm:$0xff]
    %v68 = vld [vmem:[#allocation2 + $0x40] sm:$0xff]
    %v69 = vld [vmem:[#allocation2 + $0x48] sm:$0xff]
    %v70 = vld [vmem:[#allocation5] sm:$0xff]
    %v71 = vld [vmem:[#allocation5 + $0x8] sm:$0xf]
    %v72 = vld [vmem:[#allocation5 + $0xc] sm:$0xff]
    %v73 = vld [vmem:[#allocation5 + $0x14] sm:$0xf]
    %v74 = vld [vmem:[#allocation5 + $0x18] sm:$0xff]
    %v75 = vld [vmem:[#allocation5 + $0x20] sm:$0xf]
    %v76 = vld [vmem:[#allocation5 + $0x24] sm:$0xff]
    %v77 = vld [vmem:[#allocation5 + $0x2c] sm:$0xf]
    %v78 = vld [vmem:[#allocation5 + $0x30] sm:$0xff]
    %v79 = vld [vmem:[#allocation5 + $0x38] sm:$0xf]
    %v80 = vld [vmem:[#allocation5 + $0x3c] sm:$0xff]
    %v81 = vld [vmem:[#allocation5 + $0x44] sm:$0xf]
    %v82 = vld [vmem:[#allocation5 + $0x48] sm:$0xff]
    %v83 = vld [vmem:[#allocation5 + $0x50] sm:$0xf]
    %v84 = vld [vmem:[#allocation5 + $0x54] sm:$0xff]
    %v85 = vld [vmem:[#allocation5 + $0x5c] sm:$0xf]
    %v86 = vld [vmem:[#allocation5 + $0x60] sm:$0xff]
    %v87 = vld [vmem:[#allocation5 + $0x68] sm:$0xf]
    %v88 = vld [vmem:[#allocation5 + $0x6c] sm:$0xff]
    %v89 = vld [vmem:[#allocation5 + $0x74] sm:$0xf]
    %v90 = vld [vmem:[#allocation5 + $0x78] sm:$0xff]
    %v91 = vld [vmem:[#allocation5 + $0x80] sm:$0xf]
    %v92 = vld [vmem:[#allocation5 + $0x84] sm:$0xff]
    %v93 = vld [vmem:[#allocation5 + $0x8c] sm:$0xf]
    %v94 = vld [vmem:[#allocation5 + $0x90] sm:$0xff]
    %v95 = vld [vmem:[#allocation5 + $0x98] sm:$0xf]
    %v96 = vld [vmem:[#allocation5 + $0x9c] sm:$0xff]
    %v97 = vld [vmem:[#allocation5 + $0xa4] sm:$0xf]
    %v98 = vld [vmem:[#allocation5 + $0xa8] sm:$0xff]
    %v99 = vld [vmem:[#allocation5 + $0xb0] sm:$0xf]
    %v100 = vld [vmem:[#allocation5 + $0xb4] sm:$0xff]
    %v101 = vld [vmem:[#allocation5 + $0xbc] sm:$0xf]
    %v102 = vld [vmem:[#allocation5 + $0xc0] sm:$0xff]
    %v103 = vld [vmem:[#allocation5 + $0xc8] sm:$0xf]
    %v104 = vld [vmem:[#allocation5 + $0xcc] sm:$0xff]
    %v105 = vld [vmem:[#allocation5 + $0xd4] sm:$0xf]
    %v106 = vld [vmem:[#allocation5 + $0xd8] sm:$0xff]
    %v107 = vld [vmem:[#allocation5 + $0xe0] sm:$0xf]
    %v108 = vld [vmem:[#allocation5 + $0xe4] sm:$0xff]
    %v109 = vld [vmem:[#allocation5 + $0xec] sm:$0xf]
    %v110 = vld [vmem:[#allocation5 + $0xf0] sm:$0xff]
    %v111 = vld [vmem:[#allocation5 + $0xf8] sm:$0xf]
    %v112 = vld [vmem:[#allocation5 + $0xfc] sm:$0xff]
    %v113 = vld [vmem:[#allocation5 + $0x104] sm:$0xf]
    %v114 = vld [vmem:[#allocation5 + $0x108] sm:$0xff]
    %v115 = vld [vmem:[#allocation5 + $0x110] sm:$0xf]
    %v116 = vld [vmem:[#allocation5 + $0x114] sm:$0xff]
    %v117 = vld [vmem:[#allocation5 + $0x11c] sm:$0xf]
    %v118 = vld [vmem:[#allocation5 + $0x120] sm:$0xff]
    %v119 = vld [vmem:[#allocation5 + $0x128] sm:$0xf]
    %v120 = vld [vmem:[#allocation5 + $0x12c] sm:$0xff]
    %v121 = vld [vmem:[#allocation5 + $0x134] sm:$0xf]
    %v122 = vld [vmem:[#allocation5 + $0x138] sm:$0xff]
    %v123 = vld [vmem:[#allocation5 + $0x140] sm:$0xf]
    %v124 = vld [vmem:[#allocation5 + $0x144] sm:$0xff]
    %v125 = vld [vmem:[#allocation5 + $0x14c] sm:$0xf]
    %v126 = vld [vmem:[#allocation5 + $0x150] sm:$0xff]
    %v127 = vld [vmem:[#allocation5 + $0x158] sm:$0xf]
    %v128 = vld [vmem:[#allocation5 + $0x15c] sm:$0xff]
    %v129 = vld [vmem:[#allocation5 + $0x164] sm:$0xf]
    %v130 = vld [vmem:[#allocation5 + $0x168] sm:$0xff]
    %v131 = vld [vmem:[#allocation5 + $0x170] sm:$0xf]
    %v132 = vld [vmem:[#allocation5 + $0x174] sm:$0xff]
    %v133 = vld [vmem:[#allocation5 + $0x17c] sm:$0xf]
    %v134 = vld [vmem:[%s2] sm:$0x7]
    %v136 = vlaneseq
    %v137 = vshrl.u32 %v136, 7
    %v138 = vsub.s32 0, %v137
    %v139 = vrot.slane %v134, %v138
    %v140 = vlaneseq
    %v141 = vshrl.u32 %v140, 7
    %v142 = vsub.s32 1, %v141
    %v143 = vrot.slane %v134, %v142
    %v144 = vlaneseq
    %v145 = vshrl.u32 %v144, 7
    %v146 = vsub.s32 2, %v145
    %v147 = vrot.slane %v134, %v146
    %v161 = vunpack.c.l.b16 %v60
    %v162 = vunpack.c.h.b16 %v60
    %v163 = vunpack.c.l.b16 %v61
    %v164 = vunpack.c.h.b16 %v61
    %v165 = vunpack.c.l.b16 %v62
    %v166 = vunpack.c.h.b16 %v62
    %v167 = vunpack.c.l.b16 %v63
    %v168 = vunpack.c.h.b16 %v63
    %v169 = vunpack.c.l.b16 %v64
    %v170 = vunpack.c.h.b16 %v64
    %v171 = vunpack.c.l.b16 %v65
    %v172 = vunpack.c.h.b16 %v65
    %v173 = vunpack.c.l.b16 %v66
    %v174 = vunpack.c.h.b16 %v66
    %v175 = vunpack.c.l.b16 %v67
    %v176 = vunpack.c.h.b16 %v67
    %v177 = vunpack.c.l.b16 %v68
    %v178 = vunpack.c.h.b16 %v68
    %v179 = vunpack.c.l.b16 %v69
    %v180 = vunpack.c.h.b16 %v69
    %v181 = vpack.c.b16 %v163, %v161
    %v182 = vpack.c.b16 %v164, %v162
    %v183 = vpack.c.b16 %v167, %v165
    %v184 = vpack.c.b16 %v168, %v166
    %v185 = vpack.c.b16 %v171, %v169
    %v186 = vpack.c.b16 %v172, %v170
    %v187 = vpack.c.b16 %v175, %v173
    %v188 = vpack.c.b16 %v176, %v174
    %v189 = vpack.c.b16 %v179, %v177
    %v190 = vpack.c.b16 %v180, %v178
    %v265 = vunpack.c.l.b16 %v70
    %v266 = vunpack.c.h.b16 %v70
    %v267 = vunpack.c.l.b16 %v71
    %v268 = vunpack.c.l.b16 %v72
    %v269 = vunpack.c.h.b16 %v72
    %v270 = vunpack.c.l.b16 %v73
    %v271 = vunpack.c.l.b16 %v74
    %v272 = vunpack.c.h.b16 %v74
    %v273 = vunpack.c.l.b16 %v75
    %v274 = vunpack.c.l.b16 %v76
    %v275 = vunpack.c.h.b16 %v76
    %v276 = vunpack.c.l.b16 %v77
    %v277 = vunpack.c.l.b16 %v78
    %v278 = vunpack.c.h.b16 %v78
    %v279 = vunpack.c.l.b16 %v79
    %v280 = vunpack.c.l.b16 %v80
    %v281 = vunpack.c.h.b16 %v80
    %v282 = vunpack.c.l.b16 %v81
    %v283 = vunpack.c.l.b16 %v82
    %v284 = vunpack.c.h.b16 %v82
    %v285 = vunpack.c.l.b16 %v83
    %v286 = vunpack.c.l.b16 %v84
    %v287 = vunpack.c.h.b16 %v84
    %v288 = vunpack.c.l.b16 %v85
    %v289 = vunpack.c.l.b16 %v86
    %v290 = vunpack.c.h.b16 %v86
    %v291 = vunpack.c.l.b16 %v87
    %v292 = vunpack.c.l.b16 %v88
    %v293 = vunpack.c.h.b16 %v88
    %v294 = vunpack.c.l.b16 %v89
    %v295 = vunpack.c.l.b16 %v90
    %v296 = vunpack.c.h.b16 %v90
    %v297 = vunpack.c.l.b16 %v91
    %v298 = vunpack.c.l.b16 %v92
    %v299 = vunpack.c.h.b16 %v92
    %v300 = vunpack.c.l.b16 %v93
    %v301 = vunpack.c.l.b16 %v94
    %v302 = vunpack.c.h.b16 %v94
    %v303 = vunpack.c.l.b16 %v95
    %v304 = vunpack.c.l.b16 %v96
    %v305 = vunpack.c.h.b16 %v96
    %v306 = vunpack.c.l.b16 %v97
    %v307 = vunpack.c.l.b16 %v98
    %v308 = vunpack.c.h.b16 %v98
    %v309 = vunpack.c.l.b16 %v99
    %v310 = vunpack.c.l.b16 %v100
    %v311 = vunpack.c.h.b16 %v100
    %v312 = vunpack.c.l.b16 %v101
    %v313 = vunpack.c.l.b16 %v102
    %v314 = vunpack.c.h.b16 %v102
    %v315 = vunpack.c.l.b16 %v103
    %v316 = vunpack.c.l.b16 %v104
    %v317 = vunpack.c.h.b16 %v104
    %v318 = vunpack.c.l.b16 %v105
    %v319 = vunpack.c.l.b16 %v106
    %v320 = vunpack.c.h.b16 %v106
    %v321 = vunpack.c.l.b16 %v107
    %v322 = vunpack.c.l.b16 %v108
    %v323 = vunpack.c.h.b16 %v108
    %v324 = vunpack.c.l.b16 %v109
    %v325 = vunpack.c.l.b16 %v110
    %v326 = vunpack.c.h.b16 %v110
    %v327 = vunpack.c.l.b16 %v111
    %v328 = vunpack.c.l.b16 %v112
    %v329 = vunpack.c.h.b16 %v112
    %v330 = vunpack.c.l.b16 %v113
    %v331 = vunpack.c.l.b16 %v114
    %v332 = vunpack.c.h.b16 %v114
    %v333 = vunpack.c.l.b16 %v115
    %v334 = vunpack.c.l.b16 %v116
    %v335 = vunpack.c.h.b16 %v116
    %v336 = vunpack.c.l.b16 %v117
    %v337 = vunpack.c.l.b16 %v118
    %v338 = vunpack.c.h.b16 %v118
    %v339 = vunpack.c.l.b16 %v119
    %v340 = vunpack.c.l.b16 %v120
    %v341 = vunpack.c.h.b16 %v120
    %v342 = vunpack.c.l.b16 %v121
    %v343 = vunpack.c.l.b16 %v122
    %v344 = vunpack.c.h.b16 %v122
    %v345 = vunpack.c.l.b16 %v123
    %v346 = vunpack.c.l.b16 %v124
    %v347 = vunpack.c.h.b16 %v124
    %v348 = vunpack.c.l.b16 %v125
    %v349 = vunpack.c.l.b16 %v126
    %v350 = vunpack.c.h.b16 %v126
    %v351 = vunpack.c.l.b16 %v127
    %v352 = vunpack.c.l.b16 %v128
    %v353 = vunpack.c.h.b16 %v128
    %v354 = vunpack.c.l.b16 %v129
    %v355 = vunpack.c.l.b16 %v130
    %v356 = vunpack.c.h.b16 %v130
    %v357 = vunpack.c.l.b16 %v131
    %v358 = vunpack.c.l.b16 %v132
    %v359 = vunpack.c.h.b16 %v132
    %v360 = vunpack.c.l.b16 %v133
    %v361 = vpack.c.b16 %v268, %v265
    %v362 = vpack.c.b16 %v269, %v266
    %v363 = vpack.c.b16 %v270, %v267
    %v364 = vpack.c.b16 %v274, %v271
    %v365 = vpack.c.b16 %v275, %v272
    %v366 = vpack.c.b16 %v276, %v273
    %v367 = vpack.c.b16 %v280, %v277
    %v368 = vpack.c.b16 %v281, %v278
    %v369 = vpack.c.b16 %v282, %v279
    %v370 = vpack.c.b16 %v286, %v283
    %v371 = vpack.c.b16 %v287, %v284
    %v372 = vpack.c.b16 %v288, %v285
    %v373 = vpack.c.b16 %v292, %v289
    %v374 = vpack.c.b16 %v293, %v290
    %v375 = vpack.c.b16 %v294, %v291
    %v376 = vpack.c.b16 %v298, %v295
    %v377 = vpack.c.b16 %v299, %v296
    %v378 = vpack.c.b16 %v300, %v297
    %v379 = vpack.c.b16 %v304, %v301
    %v380 = vpack.c.b16 %v305, %v302
    %v381 = vpack.c.b16 %v306, %v303
    %v382 = vpack.c.b16 %v310, %v307
    %v383 = vpack.c.b16 %v311, %v308
    %v384 = vpack.c.b16 %v312, %v309
    %v385 = vpack.c.b16 %v316, %v313
    %v386 = vpack.c.b16 %v317, %v314
    %v387 = vpack.c.b16 %v318, %v315
    %v388 = vpack.c.b16 %v322, %v319
    %v389 = vpack.c.b16 %v323, %v320
    %v390 = vpack.c.b16 %v324, %v321
    %v391 = vpack.c.b16 %v328, %v325
    %v392 = vpack.c.b16 %v329, %v326
    %v393 = vpack.c.b16 %v330, %v327
    %v394 = vpack.c.b16 %v334, %v331
    %v395 = vpack.c.b16 %v335, %v332
    %v396 = vpack.c.b16 %v336, %v333
    %v397 = vpack.c.b16 %v340, %v337
    %v398 = vpack.c.b16 %v341, %v338
    %v399 = vpack.c.b16 %v342, %v339
    %v400 = vpack.c.b16 %v346, %v343
    %v401 = vpack.c.b16 %v347, %v344
    %v402 = vpack.c.b16 %v348, %v345
    %v403 = vpack.c.b16 %v352, %v349
    %v404 = vpack.c.b16 %v353, %v350
    %v405 = vpack.c.b16 %v354, %v351
    %v406 = vpack.c.b16 %v358, %v355
    %v407 = vpack.c.b16 %v359, %v356
    %v408 = vpack.c.b16 %v360, %v357
    %457 = vmatprep.subr.bf16.mxu0 %v383
    %458 = vmatpush1.bf16.msra.mxu0 %v382
    %459 = vmatprep.subr.bf16.mxu0 %v380
    %460 = vmatpush1.bf16.msra.mxu0 %v379
    %461 = vmatprep.subr.bf16.mxu0 %v377
    %462 = vmatpush1.bf16.msra.mxu0 %v376
    %463 = vmatprep.subr.bf16.mxu0 %v374
    %464 = vmatpush1.bf16.msra.mxu0 %v373
    %465 = vmatprep.subr.bf16.mxu0 %v371
    %466 = vmatpush1.bf16.msra.mxu0 %v370
    %467 = vmatprep.subr.bf16.mxu0 %v368
    %468 = vmatpush1.bf16.msra.mxu0 %v367
    %469 = vmatprep.subr.bf16.mxu0 %v365
    %470 = vmatpush1.bf16.msra.mxu0 %v364
    %471 = vmatprep.subr.bf16.mxu0 %v362
    %472 = vmatpush1.bf16.msra.mxu0 %v361
    %473 = vmatprep.subr.bf16.mxu0 %v407
    %474 = vmatpush2.bf16.msra.mxu0 %v406
    %475 = vmatprep.subr.bf16.mxu0 %v404
    %476 = vmatpush2.bf16.msra.mxu0 %v403
    %477 = vmatprep.subr.bf16.mxu0 %v401
    %478 = vmatpush2.bf16.msra.mxu0 %v400
    %479 = vmatprep.subr.bf16.mxu0 %v398
    %480 = vmatpush2.bf16.msra.mxu0 %v397
    %481 = vmatprep.subr.bf16.mxu0 %v395
    %482 = vmatpush2.bf16.msra.mxu0 %v394
    %483 = vmatprep.subr.bf16.mxu0 %v392
    %484 = vmatpush2.bf16.msra.mxu0 %v391
    %485 = vmatprep.subr.bf16.mxu0 %v389
    %486 = vmatpush2.bf16.msra.mxu0 %v388
    %487 = vmatprep.subr.bf16.mxu0 %v386
    %488 = vmatpush2.bf16.msra.mxu0 %v385
    %489 = vmatprep.mubr.bf16.mxu0 %v182
    %490 = vmatmul.mubr.bf16.gmra.mxu0 %v181
    %v491 = vpop.f32.mrf.mxu0
    %v492 = vadd.f32 %v139, %v491
    %v493 = vpop.f32.mrf.mxu0
    %v494 = vadd.f32 %v143, %v493
    %v495 = vpop.f32.mrf.mxu0
    %v496 = vadd.f32 %v139, %v495
    %v497 = vpop.f32.mrf.mxu0
    %v498 = vadd.f32 %v143, %v497
    %499 = vmatprep.mubr.bf16.mxu0 %v184
    %500 = vmatmul.mubr.bf16.gmra.mxu0 %v183
    %v501 = vpop.f32.mrf.mxu0
    %v502 = vadd.f32 %v139, %v501
    %v503 = vpop.f32.mrf.mxu0
    %v504 = vadd.f32 %v143, %v503
    %v505 = vpop.f32.mrf.mxu0
    %v506 = vadd.f32 %v139, %v505
    %v507 = vpop.f32.mrf.mxu0
    %v508 = vadd.f32 %v143, %v507
    %509 = vmatprep.mubr.bf16.mxu0 %v186
    %510 = vmatmul.mubr.bf16.gmra.mxu0 %v185
    %v511 = vpop.f32.mrf.mxu0
    %v512 = vadd.f32 %v139, %v511
    %v513 = vpop.f32.mrf.mxu0
    %v514 = vadd.f32 %v143, %v513
    %v515 = vpop.f32.mrf.mxu0
    %v516 = vadd.f32 %v139, %v515
    %v517 = vpop.f32.mrf.mxu0
    %v518 = vadd.f32 %v143, %v517
    %519 = vmatprep.mubr.bf16.mxu0 %v188
    %520 = vmatmul.mubr.bf16.gmra.mxu0 %v187
    %v521 = vpop.f32.mrf.mxu0
    %v522 = vadd.f32 %v139, %v521
    %v523 = vpop.f32.mrf.mxu0
    %v524 = vadd.f32 %v143, %v523
    %v525 = vpop.f32.mrf.mxu0
    %v526 = vadd.f32 %v139, %v525
    %v527 = vpop.f32.mrf.mxu0
    %v528 = vadd.f32 %v143, %v527
    %529 = vmatprep.mubr.bf16.mxu0 %v190
    %530 = vmatmul.mubr.bf16.gmra.mxu0 %v189
    %v531 = vpop.f32.mrf.mxu0
    %v532 = vadd.f32 %v139, %v531
    %v533 = vpop.f32.mrf.mxu0
    %v534 = vadd.f32 %v143, %v533
    %v535 = vpop.f32.mrf.mxu0
    %v536 = vadd.f32 %v139, %v535
    %v537 = vpop.f32.mrf.mxu0
    %v538 = vadd.f32 %v143, %v537
    %539 = vdwg.mxu0
    %540 = vmatprep.subr.bf16.mxu0 0
    %541 = vmatpush1.bf16.msra.mxu0 %v384
    %542 = vmatprep.subr.bf16.mxu0 0
    %543 = vmatpush1.bf16.msra.mxu0 %v381
    %544 = vmatprep.subr.bf16.mxu0 0
    %545 = vmatpush1.bf16.msra.mxu0 %v378
    %546 = vmatprep.subr.bf16.mxu0 0
    %547 = vmatpush1.bf16.msra.mxu0 %v375
    %548 = vmatprep.subr.bf16.mxu0 0
    %549 = vmatpush1.bf16.msra.mxu0 %v372
    %550 = vmatprep.subr.bf16.mxu0 0
    %551 = vmatpush1.bf16.msra.mxu0 %v369
    %552 = vmatprep.subr.bf16.mxu0 0
    %553 = vmatpush1.bf16.msra.mxu0 %v366
    %554 = vmatprep.subr.bf16.mxu0 0
    %555 = vmatpush1.bf16.msra.mxu0 %v363
    %556 = vmatprep.subr.bf16.mxu0 0
    %557 = vmatpush2.bf16.msra.mxu0 %v408
    %558 = vmatprep.subr.bf16.mxu0 0
    %559 = vmatpush2.bf16.msra.mxu0 %v405
    %560 = vmatprep.subr.bf16.mxu0 0
    %561 = vmatpush2.bf16.msra.mxu0 %v402
    %562 = vmatprep.subr.bf16.mxu0 0
    %563 = vmatpush2.bf16.msra.mxu0 %v399
    %564 = vmatprep.subr.bf16.mxu0 0
    %565 = vmatpush2.bf16.msra.mxu0 %v396
    %566 = vmatprep.subr.bf16.mxu0 0
    %567 = vmatpush2.bf16.msra.mxu0 %v393
    %568 = vmatprep.subr.bf16.mxu0 0
    %569 = vmatpush2.bf16.msra.mxu0 %v390
    %570 = vmatprep.subr.bf16.mxu0 0
    %571 = vmatpush2.bf16.msra.mxu0 %v387
    %572 = vmatprep.mubr.bf16.mxu0 %v182
    %573 = vmatmul.mubr.bf16.gmra.mxu0 %v181
    %v574 = vpop.f32.mrf.mxu0
    %v575 = vadd.f32 %v147, %v574
    %v576 = vpop.f32.mrf.mxu0
    %v577 = vpop.f32.mrf.mxu0
    %v578 = vadd.f32 %v147, %v577
    %v579 = vpop.f32.mrf.mxu0
    %580 = vmatprep.mubr.bf16.mxu0 %v184
    %581 = vmatmul.mubr.bf16.gmra.mxu0 %v183
    %v582 = vpop.f32.mrf.mxu0
    %v583 = vadd.f32 %v147, %v582
    %v584 = vpop.f32.mrf.mxu0
    %v585 = vpop.f32.mrf.mxu0
    %v586 = vadd.f32 %v147, %v585
    %v587 = vpop.f32.mrf.mxu0
    %588 = vmatprep.mubr.bf16.mxu0 %v186
    %589 = vmatmul.mubr.bf16.gmra.mxu0 %v185
    %v590 = vpop.f32.mrf.mxu0
    %v591 = vadd.f32 %v147, %v590
    %v592 = vpop.f32.mrf.mxu0
    %v593 = vpop.f32.mrf.mxu0
    %v594 = vadd.f32 %v147, %v593
    %v595 = vpop.f32.mrf.mxu0
    %596 = vmatprep.mubr.bf16.mxu0 %v188
    %597 = vmatmul.mubr.bf16.gmra.mxu0 %v187
    %v598 = vpop.f32.mrf.mxu0
    %v599 = vadd.f32 %v147, %v598
    %v600 = vpop.f32.mrf.mxu0
    %v601 = vpop.f32.mrf.mxu0
    %v602 = vadd.f32 %v147, %v601
    %v603 = vpop.f32.mrf.mxu0
    %604 = vmatprep.mubr.bf16.mxu0 %v190
    %605 = vmatmul.mubr.bf16.gmra.mxu0 %v189
    %v606 = vpop.f32.mrf.mxu0
    %v607 = vadd.f32 %v147, %v606
    %v608 = vpop.f32.mrf.mxu0
    %v609 = vpop.f32.mrf.mxu0
    %v610 = vadd.f32 %v147, %v609
    %v611 = vpop.f32.mrf.mxu0
    %612 = vdwg.mxu0
    %v613 = vld [vmem:[#allocation7] sm:$0xff]
    %v614 = vld [vmem:[#allocation7 + $0x8] sm:$0xf]
    %v615 = vld [vmem:[#allocation7 + $0xc] sm:$0xff]
    %v616 = vld [vmem:[#allocation7 + $0x14] sm:$0xf]
    %v617 = vld [vmem:[#allocation7 + $0x18] sm:$0xff]
    %v618 = vld [vmem:[#allocation7 + $0x20] sm:$0xf]
    %v619 = vld [vmem:[#allocation7 + $0x24] sm:$0xff]
    %v620 = vld [vmem:[#allocation7 + $0x2c] sm:$0xf]
    %v621 = vld [vmem:[#allocation7 + $0x30] sm:$0xff]
    %v622 = vld [vmem:[#allocation7 + $0x38] sm:$0xf]
    %v623 = vld [vmem:[#allocation7 + $0x3c] sm:$0xff]
    %v624 = vld [vmem:[#allocation7 + $0x44] sm:$0xf]
    %v625 = vld [vmem:[#allocation7 + $0x48] sm:$0xff]
    %v626 = vld [vmem:[#allocation7 + $0x50] sm:$0xf]
    %v627 = vld [vmem:[#allocation7 + $0x54] sm:$0xff]
    %v628 = vld [vmem:[#allocation7 + $0x5c] sm:$0xf]
    %v629 = vld [vmem:[#allocation7 + $0x60] sm:$0xff]
    %v630 = vld [vmem:[#allocation7 + $0x68] sm:$0xf]
    %v631 = vld [vmem:[#allocation7 + $0x6c] sm:$0xff]
    %v632 = vld [vmem:[#allocation7 + $0x74] sm:$0xf]
    %v633 = vunpack.c.l.bf16 %v613
    %v634 = vunpack.c.h.bf16 %v613
    %v635 = vunpack.c.l.bf16 %v614
    %v636 = vunpack.c.l.bf16 %v615
    %v637 = vunpack.c.h.bf16 %v615
    %v638 = vunpack.c.l.bf16 %v616
    %v639 = vunpack.c.l.bf16 %v617
    %v640 = vunpack.c.h.bf16 %v617
    %v641 = vunpack.c.l.bf16 %v618
    %v642 = vunpack.c.l.bf16 %v619
    %v643 = vunpack.c.h.bf16 %v619
    %v644 = vunpack.c.l.bf16 %v620
    %v645 = vunpack.c.l.bf16 %v621
    %v646 = vunpack.c.h.bf16 %v621
    %v647 = vunpack.c.l.bf16 %v622
    %v648 = vunpack.c.l.bf16 %v623
    %v649 = vunpack.c.h.bf16 %v623
    %v650 = vunpack.c.l.bf16 %v624
    %v651 = vunpack.c.l.bf16 %v625
    %v652 = vunpack.c.h.bf16 %v625
    %v653 = vunpack.c.l.bf16 %v626
    %v654 = vunpack.c.l.bf16 %v627
    %v655 = vunpack.c.h.bf16 %v627
    %v656 = vunpack.c.l.bf16 %v628
    %v657 = vunpack.c.l.bf16 %v629
    %v658 = vunpack.c.h.bf16 %v629
    %v659 = vunpack.c.l.bf16 %v630
    %v660 = vunpack.c.l.bf16 %v631
    %v661 = vunpack.c.h.bf16 %v631
    %v662 = vunpack.c.l.bf16 %v632
    %v663 = vadd.f32 %v492, %v633
    %v664 = vadd.f32 %v494, %v634
    %v665 = vadd.f32 %v575, %v635
    %v666 = vadd.f32 %v496, %v636
    %v667 = vadd.f32 %v498, %v637
    %v668 = vadd.f32 %v578, %v638
    %v669 = vadd.f32 %v502, %v639
    %v670 = vadd.f32 %v504, %v640
    %v671 = vadd.f32 %v583, %v641
    %v672 = vadd.f32 %v506, %v642
    %v673 = vadd.f32 %v508, %v643
    %v674 = vadd.f32 %v586, %v644
    %v675 = vadd.f32 %v512, %v645
    %v676 = vadd.f32 %v514, %v646
    %v677 = vadd.f32 %v591, %v647
    %v678 = vadd.f32 %v516, %v648
    %v679 = vadd.f32 %v518, %v649
    %v680 = vadd.f32 %v594, %v650
    %v681 = vadd.f32 %v522, %v651
    %v682 = vadd.f32 %v524, %v652
    %v683 = vadd.f32 %v599, %v653
    %v684 = vadd.f32 %v526, %v654
    %v685 = vadd.f32 %v528, %v655
    %v686 = vadd.f32 %v602, %v656
    %v687 = vadd.f32 %v532, %v657
    %v688 = vadd.f32 %v534, %v658
    %v689 = vadd.f32 %v607, %v659
    %v690 = vadd.f32 %v536, %v660
    %v691 = vadd.f32 %v538, %v661
    %v692 = vadd.f32 %v610, %v662
    %v693 = vmax.f32 %v663, 0.0
    %v694 = vmax.f32 %v664, 0.0
    %v695 = vmax.f32 %v665, 0.0
    %v696 = vmax.f32 %v666, 0.0
    %v697 = vmax.f32 %v667, 0.0
    %v698 = vmax.f32 %v668, 0.0
    %v699 = vmax.f32 %v669, 0.0
    %v700 = vmax.f32 %v670, 0.0
    %v701 = vmax.f32 %v671, 0.0
    %v702 = vmax.f32 %v672, 0.0
    %v703 = vmax.f32 %v673, 0.0
    %v704 = vmax.f32 %v674, 0.0
    %v705 = vmax.f32 %v675, 0.0
    %v706 = vmax.f32 %v676, 0.0
    %v707 = vmax.f32 %v677, 0.0
    %v708 = vmax.f32 %v678, 0.0
    %v709 = vmax.f32 %v679, 0.0
    %v710 = vmax.f32 %v680, 0.0
    %v711 = vmax.f32 %v681, 0.0
    %v712 = vmax.f32 %v682, 0.0
    %v713 = vmax.f32 %v683, 0.0
    %v714 = vmax.f32 %v684, 0.0
    %v715 = vmax.f32 %v685, 0.0
    %v716 = vmax.f32 %v686, 0.0
    %v717 = vmax.f32 %v687, 0.0
    %v718 = vmax.f32 %v688, 0.0
    %v719 = vmax.f32 %v689, 0.0
    %v720 = vmax.f32 %v690, 0.0
    %v721 = vmax.f32 %v691, 0.0
    %v722 = vmax.f32 %v692, 0.0
    %v723 = vpack.c.bf16 %v696, %v693
    %v724 = vpack.c.bf16 %v697, %v694
    %v725 = vpack.c.bf16 %v698, %v695
    %v726 = vpack.c.bf16 %v702, %v699
    %v727 = vpack.c.bf16 %v703, %v700
    %v728 = vpack.c.bf16 %v704, %v701
    %v729 = vpack.c.bf16 %v708, %v705
    %v730 = vpack.c.bf16 %v709, %v706
    %v731 = vpack.c.bf16 %v710, %v707
    %v732 = vpack.c.bf16 %v714, %v711
    %v733 = vpack.c.bf16 %v715, %v712
    %v734 = vpack.c.bf16 %v716, %v713
    %v735 = vpack.c.bf16 %v720, %v717
    %v736 = vpack.c.bf16 %v721, %v718
    %v737 = vpack.c.bf16 %v722, %v719
    %v753 = vunpack.c.l.b16 %v723
    %v754 = vunpack.c.l.b16 %v724
    %v755 = vunpack.c.l.b16 %v725
    %v756 = vunpack.c.h.b16 %v723
    %v757 = vunpack.c.h.b16 %v724
    %v758 = vunpack.c.h.b16 %v725
    %v759 = vunpack.c.l.b16 %v726
    %v760 = vunpack.c.l.b16 %v727
    %v761 = vunpack.c.l.b16 %v728
    %v762 = vunpack.c.h.b16 %v726
    %v763 = vunpack.c.h.b16 %v727
    %v764 = vunpack.c.h.b16 %v728
    %v765 = vunpack.c.l.b16 %v729
    %v766 = vunpack.c.l.b16 %v730
    %v767 = vunpack.c.l.b16 %v731
    %v768 = vunpack.c.h.b16 %v729
    %v769 = vunpack.c.h.b16 %v730
    %v770 = vunpack.c.h.b16 %v731
    %v771 = vunpack.c.l.b16 %v732
    %v772 = vunpack.c.l.b16 %v733
    %v773 = vunpack.c.l.b16 %v734
    %v774 = vunpack.c.h.b16 %v732
    %v775 = vunpack.c.h.b16 %v733
    %v776 = vunpack.c.h.b16 %v734
    %v777 = vunpack.c.l.b16 %v735
    %v778 = vunpack.c.l.b16 %v736
    %v779 = vunpack.c.l.b16 %v737
    %v780 = vunpack.c.h.b16 %v735
    %v781 = vunpack.c.h.b16 %v736
    %v782 = vunpack.c.h.b16 %v737
    %v783 = vpack.c.b16 %v754, %v753
    %v784 = vpack.c.b16 %v755, %v755
    %v785 = vpack.c.b16 %v757, %v756
    %v786 = vpack.c.b16 %v758, %v758
    %v787 = vpack.c.b16 %v760, %v759
    %v788 = vpack.c.b16 %v761, %v761
    %v789 = vpack.c.b16 %v763, %v762
    %v790 = vpack.c.b16 %v764, %v764
    %v791 = vpack.c.b16 %v766, %v765
    %v792 = vpack.c.b16 %v767, %v767
    %v793 = vpack.c.b16 %v769, %v768
    %v794 = vpack.c.b16 %v770, %v770
    %v795 = vpack.c.b16 %v772, %v771
    %v796 = vpack.c.b16 %v773, %v773
    %v797 = vpack.c.b16 %v775, %v774
    %v798 = vpack.c.b16 %v776, %v776
    %v799 = vpack.c.b16 %v778, %v777
    %v800 = vpack.c.b16 %v779, %v779
    %v801 = vpack.c.b16 %v781, %v780
    %v802 = vpack.c.b16 %v782, %v782
    %823 = vst [vmem:[#allocation8] sm:$0xff] %v783
    %824 = vst [vmem:[#allocation8 + $0x8] sm:$0xf] %v784
    %825 = vst [vmem:[#allocation8 + $0xc] sm:$0xff] %v785
    %826 = vst [vmem:[#allocation8 + $0x14] sm:$0xf] %v786
    %827 = vst [vmem:[#allocation8 + $0x18] sm:$0xff] %v787
    %828 = vst [vmem:[#allocation8 + $0x20] sm:$0xf] %v788
    %829 = vst [vmem:[#allocation8 + $0x24] sm:$0xff] %v789
    %830 = vst [vmem:[#allocation8 + $0x2c] sm:$0xf] %v790
    %831 = vst [vmem:[#allocation8 + $0x30] sm:$0xff] %v791
    %832 = vst [vmem:[#allocation8 + $0x38] sm:$0xf] %v792
    %833 = vst [vmem:[#allocation8 + $0x3c] sm:$0xff] %v793
    %834 = vst [vmem:[#allocation8 + $0x44] sm:$0xf] %v794
    %835 = vst [vmem:[#allocation8 + $0x48] sm:$0xff] %v795
    %836 = vst [vmem:[#allocation8 + $0x50] sm:$0xf] %v796
    %837 = vst [vmem:[#allocation8 + $0x54] sm:$0xff] %v797
    %838 = vst [vmem:[#allocation8 + $0x5c] sm:$0xf] %v798
    %839 = vst [vmem:[#allocation8 + $0x60] sm:$0xff] %v799
    %840 = vst [vmem:[#allocation8 + $0x68] sm:$0xf] %v800
    %841 = vst [vmem:[#allocation8 + $0x6c] sm:$0xff] %v801
    %842 = vst [vmem:[#allocation8 + $0x74] sm:$0xf] %v802
    // Predicated region
    $region30: #{tpu_custom_call.1} parent=1 // pred_check
      _
    $region31: #{tpu_custom_call.1} parent=1 // pred_check_branch
      %844 = sbr.rel (0) target = $region33
    $region32: #{tpu_custom_call.1} parent=1 // pred_region
      %s846 = ssub.s32 1920, 1920
      %847 = vsyncadd [#allocation4], %s846
      %s848 = sshll.u32 [#allocation8], 4
      %s849 = int_to_ptr.vmem [resolvable:$true] %s848
      %854 = dma.vmem_to_hbm [thread:$0]  %s849, 1920, %s4, [#allocation4], 192, 192, 12
    $region33: #{tpu_custom_call.1} parent=1 // pred_fallthru
      _
    // Predicated region
    $region34: #{tpu_custom_call.1} parent=1 // pred_check
      _
    $region35: #{tpu_custom_call.1} parent=1 // pred_check_branch
      %856 = sbr.rel (0) target = $region37
    $region36: #{tpu_custom_call.1} parent=1 // pred_region
      %857 = dma.done [#allocation4], 1920
    $region37: #{tpu_custom_call.1} parent=1 // pred_fallthru
      _
    %858 = vsyncpa [#allocation3], 1
    %859 = vsyncpa [#allocation6], 1
    %860 = vsyncpa [#allocation4], 1

</llo_original>
